<compile_context>
chip_gen: v7x
topology: tpu7x:2x2x1
jax: 0.10.0
libtpu: 0.0.40
codegen_flags: <defaults>
</compile_context>

<pallas_src>
import functools

import jax
import jax.numpy as jnp
import numpy as np
from jax.experimental import pallas as pl
from jax.experimental.pallas import tpu as pltpu


def _concat_kernel(y_ref, f_ref, out_ref):
    """y_ref: (TB, C); f_ref: (TB, K); out_ref: (TB, C + K). Pure copy."""
    c = y_ref.shape[1]
    out_ref[:, :c] = y_ref[...]
    out_ref[:, c:] = f_ref[...]


def _sublane_multiple(dtype) -> int:
    # 32-bit -> 8, 16-bit -> 16, 8-bit -> 32 (sub-32-bit packs along sublanes).
    itemsize = jnp.dtype(dtype).itemsize
    return max(8, 32 // max(itemsize, 1))


def _choose_row_tile(n_rows: int, out_cols: int, dtype) -> int:
    """Byte-budgeted row tile, rounded to the dtype's sublane multiple."""
    sub = _sublane_multiple(dtype)
    if n_rows <= sub:
        return n_rows  # full extent; allowed even if not a multiple of 8
    bytes_per_row = max(out_cols * jnp.dtype(dtype).itemsize, 1)
    target_stream_bytes = 4 << 20          # ~4 MiB output tile per step
    tb = target_stream_bytes // bytes_per_row
    # Cap total double-buffered VMEM: 2 * (y + feats + out) ~= 4*TB*out_cols*B.
    vmem_cap_bytes = 24 << 20
    tb = min(tb, vmem_cap_bytes // (4 * bytes_per_row))
    tb = min(tb, n_rows)
    tb = max((tb // sub) * sub, sub)
    return int(tb)


def channels_to_features_concat(y: jax.Array, feats_slab: jax.Array) -> jax.Array:
    """Pallas equivalent of torch.cat([y, feats_slab], dim=1).

    y: (N, C); feats_slab: (N, K), same dtype as y.  Returns (N, C + K).
    """
    n, c = y.shape
    k = feats_slab.shape[1]
    out_cols = c + k
    dtype = y.dtype

    tb = _choose_row_tile(n, out_cols, dtype)
    grid = (pl.cdiv(n, tb),)

    return pl.pallas_call(
        _concat_kernel,
        out_shape=jax.ShapeDtypeStruct((n, out_cols), dtype),
        grid=grid,
        in_specs=[
            pl.BlockSpec((tb, c), lambda i: (i, 0)),
            pl.BlockSpec((tb, k), lambda i: (i, 0)),
        ],
        out_specs=pl.BlockSpec((tb, out_cols), lambda i: (i, 0)),
        compiler_params=pltpu.CompilerParams(
            dimension_semantics=("parallel",),
            vmem_limit_bytes=32 * 1024 * 1024,
        ),
    )(y, feats_slab)


# jit so host dispatch + tile-size derivation is paid once per shape/dtype.
_concat_jit = jax.jit(channels_to_features_concat)


class ChannelsToFeatures:
    """JAX/Pallas equivalent of the PyTorch ChannelsToFeatures module."""

    def __init__(self, channels):
        self.channels = list(channels)

    def __call__(self, data):
        data = dict(data)
        y = data["y"]
        assert y.ndim == 2, str(y.shape)
        n = y.shape[0]

        if not self.channels:
            data["y"] = y
            return data

        feats = [jnp.reshape(data[name], (n, 1)) for name in self.channels]
        # torch.cat type-promotes across its inputs.
        out_dtype = jnp.result_type(y.dtype, *[f.dtype for f in feats])
        feats_slab = jnp.concatenate(
            [f.astype(out_dtype) for f in feats], axis=1
        )
        _y = _concat_jit(y.astype(out_dtype), feats_slab)

        assert _y.shape[0] == y.shape[0], f"{_y.shape}, {y.shape}"
        assert _y.shape[1] == y.shape[1] + len(self.channels), (
            f"{_y.shape}, {y.shape}"
        )
        data["y"] = _y
        return data


if __name__ == "__main__":
    key = jax.random.PRNGKey(0)
    k_y, k_a, k_b, k_c = jax.random.split(key, 4)

    # Example 1: lane-dense output (C + K = 128), f32.
    n, c = 256, 125
    y = jax.random.normal(k_y, (n, c), dtype=jnp.float32)
    a = jax.random.normal(k_a, (n, 1), dtype=jnp.float32)
    b = jax.random.normal(k_b, (n, 1), dtype=jnp.float32)
    cf = jax.random.normal(k_c, (n, 1), dtype=jnp.float32)

    data = {"y": y, "a": a, "b": b, "c": cf}
    module = ChannelsToFeatures(channels=["a", "b", "c"])
    out = module(data)
    got = np.asarray(jax.block_until_ready(out["y"]))

    ref = np.concatenate(
        [np.asarray(y), np.asarray(a), np.asarray(b), np.asarray(cf)], axis=1
    )
    assert got.shape == ref.shape, (got.shape, ref.shape)
    np.testing.assert_allclose(got, ref, rtol=0, atol=0)
    # Non-'y' entries are passed through untouched.
    np.testing.assert_allclose(np.asarray(out["a"]), np.asarray(a), rtol=0, atol=0)

    # Example 2: narrow columns + row count not a multiple of the row tile.
    k2 = jax.random.split(jax.random.PRNGKey(1), 3)
    n2 = 22
    y2 = jax.random.normal(k2[0], (n2, 32), dtype=jnp.float32)
    f2 = jax.random.normal(k2[1], (n2, 1), dtype=jnp.float32)
    g2 = jax.random.normal(k2[2], (n2,), dtype=jnp.float32)  # 1-D channel
    mod2 = ChannelsToFeatures(channels=["f", "g"])
    out2 = mod2({"y": y2, "f": f2, "g": g2})
    got2 = np.asarray(jax.block_until_ready(out2["y"]))
    ref2 = np.concatenate(
        [np.asarray(y2), np.asarray(f2), np.asarray(g2).reshape(n2, 1)], axis=1
    )
    assert got2.shape == ref2.shape, (got2.shape, ref2.shape)
    np.testing.assert_allclose(got2, ref2, rtol=0, atol=0)

    # Example 3: bf16 (exercises dtype-aware sublane rounding).
    k3 = jax.random.split(jax.random.PRNGKey(2), 2)
    n3, c3 = 48, 64
    y3 = jax.random.normal(k3[0], (n3, c3), dtype=jnp.bfloat16)
    h3 = jax.random.normal(k3[1], (n3, 1), dtype=jnp.bfloat16)
    mod3 = ChannelsToFeatures(channels=["h"])
    out3 = mod3({"y": y3, "h": h3})
    got3 = np.asarray(jax.block_until_ready(out3["y"]).astype(jnp.float32))
    ref3 = np.concatenate(
        [np.asarray(y3.astype(jnp.float32)), np.asarray(h3.astype(jnp.float32))],
        axis=1,
    )
    assert got3.shape == ref3.shape, (got3.shape, ref3.shape)
    np.testing.assert_allclose(got3, ref3, rtol=0, atol=0)

    print("KERNEL_OK")
</pallas_src>

<mosaic_0001>
module attributes {stable_mosaic.version = 11 : i64} {
  func.func @_concat_kernel(%arg0: i32, %arg1: memref<256x125xf32, #tpu.memory_space<vmem>>, %arg2: memref<256x3xf32, #tpu.memory_space<vmem>>, %arg3: memref<256x128xf32, #tpu.memory_space<vmem>>) attributes {dimension_semantics = [#tpu.dimension_semantics<parallel>], iteration_bounds = array<i64: 1>, scalar_prefetch = 0 : i64, scratch_operands = 0 : i64, tpu.core_type = #tpu.core_type<tc>, window_params = [{transform_indices = @transform_0, window_bounds = array<i64: 256, 125>}, {transform_indices = @transform_1, window_bounds = array<i64: 256, 3>}, {transform_indices = @transform_2, window_bounds = array<i64: 256, 128>}]} {
    %c0 = arith.constant 0 : index
    %c0_0 = arith.constant 0 : index
    %0 = vector.load %arg1[%c0, %c0_0] : memref<256x125xf32, #tpu.memory_space<vmem>>, vector<256x125xf32>
    %c0_1 = arith.constant 0 : index
    %c0_2 = arith.constant 0 : index
    %1 = vector.load %arg3[%c0_1, %c0_2] : memref<256x128xf32, #tpu.memory_space<vmem>>, vector<256x125xf32>
    tpu.vector_store %arg3[%c0_1, %c0_2], %0 {strides = array<i32>} : memref<256x128xf32, #tpu.memory_space<vmem>>, vector<256x125xf32>,
    %c0_3 = arith.constant 0 : index
    %c0_4 = arith.constant 0 : index
    %2 = vector.load %arg2[%c0_3, %c0_4] : memref<256x3xf32, #tpu.memory_space<vmem>>, vector<256x3xf32>
    %c0_5 = arith.constant 0 : index
    %c125 = arith.constant 125 : index
    %3 = vector.load %arg3[%c0_5, %c125] : memref<256x128xf32, #tpu.memory_space<vmem>>, vector<256x3xf32>
    tpu.vector_store %arg3[%c0_5, %c125], %2 {strides = array<i32>} : memref<256x128xf32, #tpu.memory_space<vmem>>, vector<256x3xf32>,
    return
  }
  func.func @transform_0(%arg0: i32) -> (i32, i32) {
    %c0_i32 = arith.constant 0 : i32
    %c0_i32_0 = arith.constant 0 : i32
    return %arg0, %c0_i32 : i32, i32
  }
  func.func @transform_1(%arg0: i32) -> (i32, i32) {
    %c0_i32 = arith.constant 0 : i32
    %c0_i32_0 = arith.constant 0 : i32
    return %arg0, %c0_i32 : i32, i32
  }
  func.func @transform_2(%arg0: i32) -> (i32, i32) {
    %c0_i32 = arith.constant 0 : i32
    %c0_i32_0 = arith.constant 0 : i32
    return %arg0, %c0_i32 : i32, i32
  }
}

</mosaic_0001>

<llo_original>
// kernel: channels_to_features_concat.1
$region0: #{channels_to_features_concat.1}
  #allocation0 [shape = 'u32[]', space=smem, size = 0x4, offset = 0x4, fixed_abs, tag = 'smem constant byte address 0x4 - core index']
  #allocation1 [shape = 'u32[144,128]{1,0:T(1,128)}', space=vmem, size = 0x12000, scoped, tag = 'internal scratch']
  %s0 = inlined_call_operand.vmem [shape: f32[256,125], index: 0, kind: input, shape index: {}]
  %s1 = inlined_call_operand.vmem [shape: f32[256,3], index: 1, kind: input, shape index: {}]
  %s2 = inlined_call_operand.hbm [shape: f32[256,128], index: 2, kind: output, shape index: {}]
  %s3 = sld [smem:[#allocation0]]
  $region18: #{channels_to_features_concat.1} parent=0
    _
  %s5 = ssub.s32 1, %s3
  %s6 = scalar_select 0, %s5, %s3
  $region1: #{channels_to_features_concat.1} parent=0
    #allocation2 [shape = 'u8[131072]{0}', space=vmem, size = 0x20000, scoped, tag = 'output window, operand 0, single buffered']
    #allocation3 [shape = 's32[1]{0}', space=sflag, size = 0x4, scoped, tag = 'scoped memory for channels_to_features_concat.1']
    %7 = vsyncpa [#allocation3], 0
    // Predicated region
    $region2: #{channels_to_features_concat.1} parent=1 // pred_check
      _
    $region3: #{channels_to_features_concat.1} parent=1 // pred_check_branch
      %9 = sbr.rel (0) target = $region5
    $region4: #{channels_to_features_concat.1} parent=1 // pred_region
      _
    $region5: #{channels_to_features_concat.1} parent=1 // pred_fallthru
      _
    // Predicated region
    $region6: #{channels_to_features_concat.1} parent=1 // pred_check
      _
    $region7: #{channels_to_features_concat.1} parent=1 // pred_check_branch
      %11 = sbr.rel (0) target = $region9
    $region8: #{channels_to_features_concat.1} parent=1 // pred_region
      _
    $region9: #{channels_to_features_concat.1} parent=1 // pred_fallthru
      _
    %v12 = vld [vmem:[%s0] sm:$0xff]
    %v13 = vld [vmem:[%s0 + $0x8] sm:$0xff]
    %v14 = vld [vmem:[%s0 + $0x10] sm:$0xff]
    %v15 = vld [vmem:[%s0 + $0x18] sm:$0xff]
    %v16 = vld [vmem:[%s0 + $0x20] sm:$0xff]
    %v17 = vld [vmem:[%s0 + $0x28] sm:$0xff]
    %v18 = vld [vmem:[%s0 + $0x30] sm:$0xff]
    %v19 = vld [vmem:[%s0 + $0x38] sm:$0xff]
    %v20 = vld [vmem:[%s0 + $0x40] sm:$0xff]
    %v21 = vld [vmem:[%s0 + $0x48] sm:$0xff]
    %v22 = vld [vmem:[%s0 + $0x50] sm:$0xff]
    %v23 = vld [vmem:[%s0 + $0x58] sm:$0xff]
    %v24 = vld [vmem:[%s0 + $0x60] sm:$0xff]
    %v25 = vld [vmem:[%s0 + $0x68] sm:$0xff]
    %v26 = vld [vmem:[%s0 + $0x70] sm:$0xff]
    %v27 = vld [vmem:[%s0 + $0x78] sm:$0xff]
    %v28 = vld [vmem:[%s0 + $0x80] sm:$0xff]
    %v29 = vld [vmem:[%s0 + $0x88] sm:$0xff]
    %v30 = vld [vmem:[%s0 + $0x90] sm:$0xff]
    %v31 = vld [vmem:[%s0 + $0x98] sm:$0xff]
    %v32 = vld [vmem:[%s0 + $0xa0] sm:$0xff]
    %v33 = vld [vmem:[%s0 + $0xa8] sm:$0xff]
    %v34 = vld [vmem:[%s0 + $0xb0] sm:$0xff]
    %v35 = vld [vmem:[%s0 + $0xb8] sm:$0xff]
    %v36 = vld [vmem:[%s0 + $0xc0] sm:$0xff]
    %v37 = vld [vmem:[%s0 + $0xc8] sm:$0xff]
    %v38 = vld [vmem:[%s0 + $0xd0] sm:$0xff]
    %v39 = vld [vmem:[%s0 + $0xd8] sm:$0xff]
    %v40 = vld [vmem:[%s0 + $0xe0] sm:$0xff]
    %v41 = vld [vmem:[%s0 + $0xe8] sm:$0xff]
    %v42 = vld [vmem:[%s0 + $0xf0] sm:$0xff]
    %v43 = vld [vmem:[%s0 + $0xf8] sm:$0xff]
    %vm44 = vcmask 1022976
    %45 = vst.msk [vmem:[#allocation2] sm:$0xff] %vm44, %v12
    %46 = vst.msk [vmem:[#allocation2 + $0x8] sm:$0xff] %vm44, %v13
    %47 = vst.msk [vmem:[#allocation2 + $0x10] sm:$0xff] %vm44, %v14
    %48 = vst.msk [vmem:[#allocation2 + $0x18] sm:$0xff] %vm44, %v15
    %49 = vst.msk [vmem:[#allocation2 + $0x20] sm:$0xff] %vm44, %v16
    %50 = vst.msk [vmem:[#allocation2 + $0x28] sm:$0xff] %vm44, %v17
    %51 = vst.msk [vmem:[#allocation2 + $0x30] sm:$0xff] %vm44, %v18
    %52 = vst.msk [vmem:[#allocation2 + $0x38] sm:$0xff] %vm44, %v19
    %53 = vst.msk [vmem:[#allocation2 + $0x40] sm:$0xff] %vm44, %v20
    %54 = vst.msk [vmem:[#allocation2 + $0x48] sm:$0xff] %vm44, %v21
    %55 = vst.msk [vmem:[#allocation2 + $0x50] sm:$0xff] %vm44, %v22
    %56 = vst.msk [vmem:[#allocation2 + $0x58] sm:$0xff] %vm44, %v23
    %57 = vst.msk [vmem:[#allocation2 + $0x60] sm:$0xff] %vm44, %v24
    %58 = vst.msk [vmem:[#allocation2 + $0x68] sm:$0xff] %vm44, %v25
    %59 = vst.msk [vmem:[#allocation2 + $0x70] sm:$0xff] %vm44, %v26
    %60 = vst.msk [vmem:[#allocation2 + $0x78] sm:$0xff] %vm44, %v27
    %61 = vst.msk [vmem:[#allocation2 + $0x80] sm:$0xff] %vm44, %v28
    %62 = vst.msk [vmem:[#allocation2 + $0x88] sm:$0xff] %vm44, %v29
    %63 = vst.msk [vmem:[#allocation2 + $0x90] sm:$0xff] %vm44, %v30
    %64 = vst.msk [vmem:[#allocation2 + $0x98] sm:$0xff] %vm44, %v31
    %65 = vst.msk [vmem:[#allocation2 + $0xa0] sm:$0xff] %vm44, %v32
    %66 = vst.msk [vmem:[#allocation2 + $0xa8] sm:$0xff] %vm44, %v33
    %67 = vst.msk [vmem:[#allocation2 + $0xb0] sm:$0xff] %vm44, %v34
    %68 = vst.msk [vmem:[#allocation2 + $0xb8] sm:$0xff] %vm44, %v35
    %69 = vst.msk [vmem:[#allocation2 + $0xc0] sm:$0xff] %vm44, %v36
    %70 = vst.msk [vmem:[#allocation2 + $0xc8] sm:$0xff] %vm44, %v37
    %71 = vst.msk [vmem:[#allocation2 + $0xd0] sm:$0xff] %vm44, %v38
    %72 = vst.msk [vmem:[#allocation2 + $0xd8] sm:$0xff] %vm44, %v39
    %73 = vst.msk [vmem:[#allocation2 + $0xe0] sm:$0xff] %vm44, %v40
    %74 = vst.msk [vmem:[#allocation2 + $0xe8] sm:$0xff] %vm44, %v41
    %75 = vst.msk [vmem:[#allocation2 + $0xf0] sm:$0xff] %vm44, %v42
    %76 = vst.msk [vmem:[#allocation2 + $0xf8] sm:$0xff] %vm44, %v43
    %v77 = vld [vmem:[%s1] sm:$0xff]
    %v78 = vld [vmem:[%s1 + $0x8] sm:$0xff]
    %v79 = vld [vmem:[%s1 + $0x10] sm:$0xff]
    %v80 = vld [vmem:[%s1 + $0x18] sm:$0xff]
    %v81 = vld [vmem:[%s1 + $0x20] sm:$0xff]
    %v82 = vld [vmem:[%s1 + $0x28] sm:$0xff]
    %v83 = vld [vmem:[%s1 + $0x30] sm:$0xff]
    %v84 = vld [vmem:[%s1 + $0x38] sm:$0xff]
    %v85 = vld [vmem:[%s1 + $0x40] sm:$0xff]
    %v86 = vld [vmem:[%s1 + $0x48] sm:$0xff]
    %v87 = vld [vmem:[%s1 + $0x50] sm:$0xff]
    %v88 = vld [vmem:[%s1 + $0x58] sm:$0xff]
    %v89 = vld [vmem:[%s1 + $0x60] sm:$0xff]
    %v90 = vld [vmem:[%s1 + $0x68] sm:$0xff]
    %v91 = vld [vmem:[%s1 + $0x70] sm:$0xff]
    %v92 = vld [vmem:[%s1 + $0x78] sm:$0xff]
    %v93 = vld [vmem:[%s1 + $0x80] sm:$0xff]
    %v94 = vld [vmem:[%s1 + $0x88] sm:$0xff]
    %v95 = vld [vmem:[%s1 + $0x90] sm:$0xff]
    %v96 = vld [vmem:[%s1 + $0x98] sm:$0xff]
    %v97 = vld [vmem:[%s1 + $0xa0] sm:$0xff]
    %v98 = vld [vmem:[%s1 + $0xa8] sm:$0xff]
    %v99 = vld [vmem:[%s1 + $0xb0] sm:$0xff]
    %v100 = vld [vmem:[%s1 + $0xb8] sm:$0xff]
    %v101 = vld [vmem:[%s1 + $0xc0] sm:$0xff]
    %v102 = vld [vmem:[%s1 + $0xc8] sm:$0xff]
    %v103 = vld [vmem:[%s1 + $0xd0] sm:$0xff]
    %v104 = vld [vmem:[%s1 + $0xd8] sm:$0xff]
    %v105 = vld [vmem:[%s1 + $0xe0] sm:$0xff]
    %v106 = vld [vmem:[%s1 + $0xe8] sm:$0xff]
    %v107 = vld [vmem:[%s1 + $0xf0] sm:$0xff]
    %v108 = vld [vmem:[%s1 + $0xf8] sm:$0xff]
    %141 = vrot.lane.b32.xlu0 %v77, 125
    %v142 = vpop.permute.xlu0 %141
    %143 = vrot.lane.b32.xlu0 %v78, 125
    %v144 = vpop.permute.xlu0 %143
    %145 = vrot.lane.b32.xlu0 %v79, 125
    %v146 = vpop.permute.xlu0 %145
    %147 = vrot.lane.b32.xlu0 %v80, 125
    %v148 = vpop.permute.xlu0 %147
    %149 = vrot.lane.b32.xlu0 %v81, 125
    %v150 = vpop.permute.xlu0 %149
    %151 = vrot.lane.b32.xlu0 %v82, 125
    %v152 = vpop.permute.xlu0 %151
    %153 = vrot.lane.b32.xlu0 %v83, 125
    %v154 = vpop.permute.xlu0 %153
    %155 = vrot.lane.b32.xlu0 %v84, 125
    %v156 = vpop.permute.xlu0 %155
    %157 = vrot.lane.b32.xlu0 %v85, 125
    %v158 = vpop.permute.xlu0 %157
    %159 = vrot.lane.b32.xlu0 %v86, 125
    %v160 = vpop.permute.xlu0 %159
    %161 = vrot.lane.b32.xlu0 %v87, 125
    %v162 = vpop.permute.xlu0 %161
    %163 = vrot.lane.b32.xlu0 %v88, 125
    %v164 = vpop.permute.xlu0 %163
    %165 = vrot.lane.b32.xlu0 %v89, 125
    %v166 = vpop.permute.xlu0 %165
    %167 = vrot.lane.b32.xlu0 %v90, 125
    %v168 = vpop.permute.xlu0 %167
    %169 = vrot.lane.b32.xlu0 %v91, 125
    %v170 = vpop.permute.xlu0 %169
    %171 = vrot.lane.b32.xlu0 %v92, 125
    %v172 = vpop.permute.xlu0 %171
    %173 = vrot.lane.b32.xlu0 %v93, 125
    %v174 = vpop.permute.xlu0 %173
    %175 = vrot.lane.b32.xlu0 %v94, 125
    %v176 = vpop.permute.xlu0 %175
    %177 = vrot.lane.b32.xlu0 %v95, 125
    %v178 = vpop.permute.xlu0 %177
    %179 = vrot.lane.b32.xlu0 %v96, 125
    %v180 = vpop.permute.xlu0 %179
    %181 = vrot.lane.b32.xlu0 %v97, 125
    %v182 = vpop.permute.xlu0 %181
    %183 = vrot.lane.b32.xlu0 %v98, 125
    %v184 = vpop.permute.xlu0 %183
    %185 = vrot.lane.b32.xlu0 %v99, 125
    %v186 = vpop.permute.xlu0 %185
    %187 = vrot.lane.b32.xlu0 %v100, 125
    %v188 = vpop.permute.xlu0 %187
    %189 = vrot.lane.b32.xlu0 %v101, 125
    %v190 = vpop.permute.xlu0 %189
    %191 = vrot.lane.b32.xlu0 %v102, 125
    %v192 = vpop.permute.xlu0 %191
    %193 = vrot.lane.b32.xlu0 %v103, 125
    %v194 = vpop.permute.xlu0 %193
    %195 = vrot.lane.b32.xlu0 %v104, 125
    %v196 = vpop.permute.xlu0 %195
    %197 = vrot.lane.b32.xlu0 %v105, 125
    %v198 = vpop.permute.xlu0 %197
    %199 = vrot.lane.b32.xlu0 %v106, 125
    %v200 = vpop.permute.xlu0 %199
    %201 = vrot.lane.b32.xlu0 %v107, 125
    %v202 = vpop.permute.xlu0 %201
    %203 = vrot.lane.b32.xlu0 %v108, 125
    %v204 = vpop.permute.xlu0 %203
    %vm237 = vcmask 1048552
    %238 = vst.msk [vmem:[#allocation2] sm:$0xff] %vm237, %v142
    %239 = vst.msk [vmem:[#allocation2 + $0x8] sm:$0xff] %vm237, %v144
    %240 = vst.msk [vmem:[#allocation2 + $0x10] sm:$0xff] %vm237, %v146
    %241 = vst.msk [vmem:[#allocation2 + $0x18] sm:$0xff] %vm237, %v148
    %242 = vst.msk [vmem:[#allocation2 + $0x20] sm:$0xff] %vm237, %v150
    %243 = vst.msk [vmem:[#allocation2 + $0x28] sm:$0xff] %vm237, %v152
    %244 = vst.msk [vmem:[#allocation2 + $0x30] sm:$0xff] %vm237, %v154
    %245 = vst.msk [vmem:[#allocation2 + $0x38] sm:$0xff] %vm237, %v156
    %246 = vst.msk [vmem:[#allocation2 + $0x40] sm:$0xff] %vm237, %v158
    %247 = vst.msk [vmem:[#allocation2 + $0x48] sm:$0xff] %vm237, %v160
    %248 = vst.msk [vmem:[#allocation2 + $0x50] sm:$0xff] %vm237, %v162
    %249 = vst.msk [vmem:[#allocation2 + $0x58] sm:$0xff] %vm237, %v164
    %250 = vst.msk [vmem:[#allocation2 + $0x60] sm:$0xff] %vm237, %v166
    %251 = vst.msk [vmem:[#allocation2 + $0x68] sm:$0xff] %vm237, %v168
    %252 = vst.msk [vmem:[#allocation2 + $0x70] sm:$0xff] %vm237, %v170
    %253 = vst.msk [vmem:[#allocation2 + $0x78] sm:$0xff] %vm237, %v172
    %254 = vst.msk [vmem:[#allocation2 + $0x80] sm:$0xff] %vm237, %v174
    %255 = vst.msk [vmem:[#allocation2 + $0x88] sm:$0xff] %vm237, %v176
    %256 = vst.msk [vmem:[#allocation2 + $0x90] sm:$0xff] %vm237, %v178
    %257 = vst.msk [vmem:[#allocation2 + $0x98] sm:$0xff] %vm237, %v180
    %258 = vst.msk [vmem:[#allocation2 + $0xa0] sm:$0xff] %vm237, %v182
    %259 = vst.msk [vmem:[#allocation2 + $0xa8] sm:$0xff] %vm237, %v184
    %260 = vst.msk [vmem:[#allocation2 + $0xb0] sm:$0xff] %vm237, %v186
    %261 = vst.msk [vmem:[#allocation2 + $0xb8] sm:$0xff] %vm237, %v188
    %262 = vst.msk [vmem:[#allocation2 + $0xc0] sm:$0xff] %vm237, %v190
    %263 = vst.msk [vmem:[#allocation2 + $0xc8] sm:$0xff] %vm237, %v192
    %264 = vst.msk [vmem:[#allocation2 + $0xd0] sm:$0xff] %vm237, %v194
    %265 = vst.msk [vmem:[#allocation2 + $0xd8] sm:$0xff] %vm237, %v196
    %266 = vst.msk [vmem:[#allocation2 + $0xe0] sm:$0xff] %vm237, %v198
    %267 = vst.msk [vmem:[#allocation2 + $0xe8] sm:$0xff] %vm237, %v200
    %268 = vst.msk [vmem:[#allocation2 + $0xf0] sm:$0xff] %vm237, %v202
    %269 = vst.msk [vmem:[#allocation2 + $0xf8] sm:$0xff] %vm237, %v204
    // Predicated region
    $region10: #{channels_to_features_concat.1} parent=1 // pred_check
      _
    $region11: #{channels_to_features_concat.1} parent=1 // pred_check_branch
      %271 = sbr.rel (0) target = $region13
    $region12: #{channels_to_features_concat.1} parent=1 // pred_region
      %s273 = ssub.s32 4096, 4096
      %274 = vsyncadd [#allocation3], %s273
      %s275 = sshll.u32 [#allocation2], 4
      %s276 = int_to_ptr.vmem [resolvable:$true] %s275
      %281 = dma.vmem_to_hbm [thread:$0]  %s276, 4096, %s2, [#allocation3], 128, 128, 8
    $region13: #{channels_to_features_concat.1} parent=1 // pred_fallthru
      _
    // Predicated region
    $region14: #{channels_to_features_concat.1} parent=1 // pred_check
      _
    $region15: #{channels_to_features_concat.1} parent=1 // pred_check_branch
      %283 = sbr.rel (0) target = $region17
    $region16: #{channels_to_features_concat.1} parent=1 // pred_region
      %284 = dma.done [#allocation3], 4096
    $region17: #{channels_to_features_concat.1} parent=1 // pred_fallthru
      _
    %285 = vsyncpa [#allocation3], 1

</llo_original>
